<compile_context>
chip_gen: v5e
topology: v5e:2x2
jax: 0.10.0
libtpu: 0.0.40
codegen_flags: <defaults>
</compile_context>

<pallas_src>
import jax
import jax.numpy as jnp
from jax import lax
from jax.experimental import pallas as pl
from jax.experimental.pallas import tpu as pltpu


def _round_up(x, m):
    return ((x + m - 1) // m) * m


def _make_linear_kernel(F, tk):
    ragged_k = (F % tk) != 0  # static: only trace masking code if needed

    def kernel(x_ref, w_ref, b_ref, o_ref, acc_ref):
        # x_ref: [tm, tk]  streamed batch/feature tile
        # w_ref: [C,  tk]  PyTorch layout slice (contract on F = dim 1 of both)
        # b_ref: [1,  C ]  resident
        # o_ref: [tm, C ]  written on the last k step
        # acc_ref: [tm, C] f32 accumulator scratch
        k = pl.program_id(1)

        @pl.when(k == 0)
        def _():
            acc_ref[...] = jnp.zeros_like(acc_ref)

        x = x_ref[...]
        w = w_ref[...]
        if ragged_k:
            # The last k block hangs over the end of F; padded lanes hold
            # unspecified data, so zero them before they reach the MXU.
            lim = F - k * tk
            x = jnp.where(lax.broadcasted_iota(jnp.int32, x.shape, 1) < lim, x, 0.0)
            w = jnp.where(lax.broadcasted_iota(jnp.int32, w.shape, 1) < lim, w, 0.0)

        # x @ W.T without materializing a transpose: contract on dim 1 of both.
        acc_ref[...] += lax.dot_general(
            x, w,
            dimension_numbers=(((1,), (1,)), ((), ())),
            preferred_element_type=jnp.float32,
            precision=lax.Precision.HIGHEST,  # full-f32 passes, matches nn.Linear
        )

        @pl.when(k == pl.num_programs(1) - 1)
        def _():
            o_ref[...] = (acc_ref[...] + b_ref[...]).astype(o_ref.dtype)

    return kernel


def _select_tiles(B, F, C, *, max_tm=512, vmem_budget_bytes=24 * 1024 * 1024):
    """Pick (tm, tk) so the double-buffered working set fits the VMEM budget."""
    itemsize = 4  # f32 streams

    if B <= 8:
        tm = B
    else:
        tm = min(max_tm, _round_up(B, 8))
        # Guarantee >= 2 batch tiles when possible so the "parallel" batch axis
        # actually splits across both TensorCores on v7x.
        if pl.cdiv(B, tm) < 2:
            tm = max(8, _round_up(pl.cdiv(B, 2), 8))

    def working_set(tm_, tk_):
        c_pad = max(C, 128)                      # lane-padded VMEM buffers
        return (2 * tm_ * tk_ * itemsize         # x tile, double-buffered
                + 2 * C * tk_ * itemsize         # weight tile, double-buffered
                + 2 * tm_ * c_pad * itemsize     # output buffers
                + tm_ * c_pad * itemsize         # f32 accumulator scratch
                + 2 * c_pad * itemsize)          # bias

    # Shrink tm first if even a 128-wide feature tile would not fit.
    while tm > 8 and working_set(tm, min(F, 128)) > vmem_budget_bytes:
        tm = max(8, _round_up(tm // 2, 8))

    if working_set(tm, F) <= vmem_budget_bytes:
        tk = F                                   # whole feature dim per tile
    else:
        tk = 128
        while tk * 2 < F and working_set(tm, tk * 2) <= vmem_budget_bytes:
            tk *= 2
    return tm, tk


def logistic_regression_forward(x, weight, bias, *, tile_m=None, tile_f=None):
    """Forward of the PyTorch module: x @ weight.T + bias.

    x: [B, F] f32; weight: [C, F] f32 (PyTorch nn.Linear layout); bias: [C] f32.
    """
    B, F = x.shape
    C, F_w = weight.shape
    assert F == F_w, "weight must be [num_classes, input_size]"
    assert bias.shape == (C,)

    tm_auto, tk_auto = _select_tiles(B, F, C)
    tm = tile_m if tile_m is not None else tm_auto
    tk = tile_f if tile_f is not None else tk_auto

    grid_m = pl.cdiv(B, tm)
    grid_k = pl.cdiv(F, tk)

    b2d = bias.reshape(1, C)  # 2-D for TPU-friendly broadcast in VMEM

    kernel = _make_linear_kernel(F, tk)

    return pl.pallas_call(
        kernel,
        out_shape=jax.ShapeDtypeStruct((B, C), x.dtype),
        grid=(grid_m, grid_k),
        in_specs=[
            pl.BlockSpec((tm, tk), lambda i, k: (i, k)),   # x: streamed tiles
            pl.BlockSpec((C, tk), lambda i, k: (0, k)),    # W: resident when grid_k==1
            pl.BlockSpec((1, C), lambda i, k: (0, 0)),     # bias: resident
        ],
        out_specs=pl.BlockSpec((tm, C), lambda i, k: (i, 0)),
        scratch_shapes=[pltpu.VMEM((tm, C), jnp.float32)],
        compiler_params=pltpu.CompilerParams(
            # batch axis parallel (megacore split), reduction axis arbitrary & last
            dimension_semantics=("parallel", "arbitrary"),
            vmem_limit_bytes=48 * 1024 * 1024,
        ),
    )(x, weight, b2d)


if __name__ == "__main__":
    key = jax.random.PRNGKey(0)

    # --- Case 1: small shapes consistent with the module (auto tiling) ---
    B, F, C = 64, 32, 4
    kx, kw, kb, key = jax.random.split(key, 4)
    x = jax.random.normal(kx, (B, F), dtype=jnp.float32)
    bound = 1.0 / (F ** 0.5)
    weight = jax.random.uniform(kw, (C, F), jnp.float32, -bound, bound)
    bias = jax.random.uniform(kb, (C,), jnp.float32, -bound, bound)

    out = jax.block_until_ready(logistic_regression_forward(x, weight, bias))
    ref = jnp.dot(x, weight.T, precision=lax.Precision.HIGHEST) + bias
    assert out.shape == (B, C)
    assert jnp.allclose(out, ref, atol=1e-5, rtol=1e-5)

    # --- Case 2: exercise ragged batch + F-reduction grid + ragged-K masking ---
    B2, F2, C2 = 60, 320, 4
    kx2, kw2, kb2, key = jax.random.split(key, 4)
    x2 = jax.random.normal(kx2, (B2, F2), dtype=jnp.float32)
    bound2 = 1.0 / (F2 ** 0.5)
    w2 = jax.random.uniform(kw2, (C2, F2), jnp.float32, -bound2, bound2)
    b2 = jax.random.uniform(kb2, (C2,), jnp.float32, -bound2, bound2)

    out2 = jax.block_until_ready(
        logistic_regression_forward(x2, w2, b2, tile_m=32, tile_f=128))
    ref2 = jnp.dot(x2, w2.T, precision=lax.Precision.HIGHEST) + b2
    assert out2.shape == (B2, C2)
    assert jnp.allclose(out2, ref2, atol=1e-4, rtol=1e-4)

    print("KERNEL_OK")
</pallas_src>

<mosaic_0001>
module attributes {stable_mosaic.version = 11 : i64} {
  func.func @kernel(%arg0: i32, %arg1: i32, %arg2: memref<32x32xf32, #tpu.memory_space<vmem>>, %arg3: memref<4x32xf32, #tpu.memory_space<vmem>>, %arg4: memref<1x4xf32, #tpu.memory_space<vmem>>, %arg5: memref<32x4xf32, #tpu.memory_space<vmem>>, %arg6: memref<32x4xf32, #tpu.memory_space<vmem>>) attributes {dimension_semantics = [#tpu.dimension_semantics<parallel>, #tpu.dimension_semantics<arbitrary>], iteration_bounds = array<i64: 2, 1>, scalar_prefetch = 0 : i64, scratch_operands = 1 : i64, tpu.core_type = #tpu.core_type<tc>, window_params = [{transform_indices = @transform_0, window_bounds = array<i64: 32, 32>}, {transform_indices = @transform_1, window_bounds = array<i64: 4, 32>}, {pipeline_mode = #tpu.pipeline_mode<synchronous>, transform_indices = @transform_2, window_bounds = array<i64: 1, 4>}, {transform_indices = @transform_3, window_bounds = array<i64: 32, 4>}]} {
    %c0_i32 = arith.constant 0 : i32
    %0 = arith.cmpi eq, %arg1, %c0_i32 : i32
    %1 = arith.extui %0 : i1 to i32
    %c0_i32_0 = arith.constant 0 : i32
    %2 = arith.cmpi ne, %1, %c0_i32_0 : i32
    scf.if %2 {
      %cst_10 = arith.constant 0.000000e+00 : f32
      %12 = vector.broadcast %cst_10 : f32 to vector<32x4xf32>
      %c0_11 = arith.constant 0 : index
      %c0_12 = arith.constant 0 : index
      %13 = vector.load %arg6[%c0_11, %c0_12] : memref<32x4xf32, #tpu.memory_space<vmem>>, vector<32x4xf32>
      tpu.vector_store %arg6[%c0_11, %c0_12], %12 {strides = array<i32>} : memref<32x4xf32, #tpu.memory_space<vmem>>, vector<32x4xf32>,
    } else {
    }
    %c0 = arith.constant 0 : index
    %c0_1 = arith.constant 0 : index
    %3 = vector.load %arg2[%c0, %c0_1] : memref<32x32xf32, #tpu.memory_space<vmem>>, vector<32x32xf32>
    %c0_2 = arith.constant 0 : index
    %c0_3 = arith.constant 0 : index
    %4 = vector.load %arg3[%c0_2, %c0_3] : memref<4x32xf32, #tpu.memory_space<vmem>>, vector<4x32xf32>
    %c0_4 = arith.constant 0 : index
    %c0_5 = arith.constant 0 : index
    %5 = vector.load %arg6[%c0_4, %c0_5] : memref<32x4xf32, #tpu.memory_space<vmem>>, vector<32x4xf32>
    %cst = arith.constant dense<0.000000e+00> : vector<32x4xf32>
    %6 = tpu.matmul %3, %4, %cst {dimension_numbers = #tpu.dot_dimension_numbers<[1], [1], [0], [0], [0, 0, 1, 0], [], []>, precision = #tpu.contract_precision<fp32>} : vector<32x32xf32>, vector<4x32xf32>, vector<32x4xf32> -> vector<32x4xf32>
    %7 = arith.addf %5, %6 : vector<32x4xf32>
    %c0_6 = arith.constant 0 : index
    %c0_7 = arith.constant 0 : index
    %8 = vector.load %arg6[%c0_6, %c0_7] : memref<32x4xf32, #tpu.memory_space<vmem>>, vector<32x4xf32>
    tpu.vector_store %arg6[%c0_6, %c0_7], %7 {strides = array<i32>} : memref<32x4xf32, #tpu.memory_space<vmem>>, vector<32x4xf32>,
    %c0_i32_8 = arith.constant 0 : i32
    %9 = arith.cmpi eq, %arg1, %c0_i32_8 : i32
    %10 = arith.extui %9 : i1 to i32
    %c0_i32_9 = arith.constant 0 : i32
    %11 = arith.cmpi ne, %10, %c0_i32_9 : i32
    scf.if %11 {
      %c0_10 = arith.constant 0 : index
      %c0_11 = arith.constant 0 : index
      %12 = vector.load %arg6[%c0_10, %c0_11] : memref<32x4xf32, #tpu.memory_space<vmem>>, vector<32x4xf32>
      %c0_12 = arith.constant 0 : index
      %c0_13 = arith.constant 0 : index
      %13 = vector.load %arg4[%c0_12, %c0_13] : memref<1x4xf32, #tpu.memory_space<vmem>>, vector<1x4xf32>
      %14 = vector.broadcast %13 : vector<1x4xf32> to vector<32x4xf32>
      %15 = arith.addf %12, %14 : vector<32x4xf32>
      %c0_14 = arith.constant 0 : index
      %c0_15 = arith.constant 0 : index
      %16 = vector.load %arg5[%c0_14, %c0_15] : memref<32x4xf32, #tpu.memory_space<vmem>>, vector<32x4xf32>
      tpu.vector_store %arg5[%c0_14, %c0_15], %15 {strides = array<i32>} : memref<32x4xf32, #tpu.memory_space<vmem>>, vector<32x4xf32>,
    } else {
    }
    return
  }
  func.func @transform_0(%arg0: i32, %arg1: i32) -> (i32, i32) {
    %c0_i32 = arith.constant 0 : i32
    return %arg0, %arg1 : i32, i32
  }
  func.func @transform_1(%arg0: i32, %arg1: i32) -> (i32, i32) {
    %c0_i32 = arith.constant 0 : i32
    %c0_i32_0 = arith.constant 0 : i32
    return %c0_i32, %arg1 : i32, i32
  }
  func.func @transform_2(%arg0: i32, %arg1: i32) -> (i32, i32) {
    %c0_i32 = arith.constant 0 : i32
    %c0_i32_0 = arith.constant 0 : i32
    %c0_i32_1 = arith.constant 0 : i32
    return %c0_i32, %c0_i32_0 : i32, i32
  }
  func.func @transform_3(%arg0: i32, %arg1: i32) -> (i32, i32) {
    %c0_i32 = arith.constant 0 : i32
    %c0_i32_0 = arith.constant 0 : i32
    return %arg0, %c0_i32 : i32, i32
  }
}

</mosaic_0001>

<llo_original>
// kernel: tpu_custom_call.1
$region0: #{tpu_custom_call.1}
  #allocation0 [shape = 'u32[]', space=smem, size = 0x4, offset = 0x4, fixed_abs, tag = 'smem constant byte address 0x4 - core index']
  #allocation1 [shape = 'u32[72,128]{1,0:T(1,128)}', space=vmem, size = 0x9000, scoped, tag = 'internal scratch']
  #allocation2 [shape = 'f32[32,4]{1,0:T(8,128)}', space=vmem, size = 0x4000, scoped, tag = 'scratch operand']
  %s0 = inlined_call_operand.vmem [shape: f32[64,32], index: 0, kind: input, shape index: {}]
  %s1 = inlined_call_operand.vmem [shape: f32[4,32], index: 1, kind: input, shape index: {}]
  %s2 = inlined_call_operand.vmem [shape: f32[1,4], index: 2, kind: input, shape index: {}]
  %s3 = inlined_call_operand.vmem [shape: f32[64,4], index: 3, kind: output, shape index: {}]
  %s4 = sld [smem:[#allocation0]]
  $region53: #{tpu_custom_call.1} parent=0
    _
  %s6 = ssub.s32 1, %s4
  %s7 = scalar_select 0, %s6, %s4
  loop: start=0, step=1, limit=4
  $region2: #{tpu_custom_call.1} parent=0 // loop_pre_header
    _
  $region3: #{tpu_custom_call.1} parent=0 // loop_header
    %s9 = sphi 0, %s13
    %p10 = scmp.ge.s32.totalorder %s9, 4
    %s16 = sphi 0, %s28
    %s17 = sphi 0, %s24
    %s18 = sphi 0, %s16
    %s19 = sphi 0, %s17
    %s20 = sphi 0, %s18
    %s21 = sphi 0, %s19
    %s33 = sphi 0, %s35
    %s36 = sphi 0, %s33
    %s37 = sphi 0, %s36
    %s53 = sphi 0, %s37
    %s59 = sphi 0, %s61
    %s62 = sphi 0, %s59
    %s63 = sphi 0, %s62
    %s79 = sphi 0, %s63
    %s83 = sphi 0, %s83
    %s85 = sphi 0, %s83
    %s86 = sphi 0, %s85
    %s100 = sphi 0, %s86
    %s106 = sphi 0, %s108
    %s109 = sphi 0, %s106
    %s110 = sphi 0, %s109
    %s126 = sphi 0, %s110
  $region4: #{tpu_custom_call.1} parent=0 // loop_header_branch
    %12 = sbr.rel (%p10) target = $region8
  $region5: #{tpu_custom_call.1} parent=0 // loop_body
    %s14 = ssub.s32 %s9, 1
    %s15 = ssub.s32 %s9, 2
    %s22 = sadd.s32 1, %s17
    %p23 = scmp.ge.s32.totalorder %s22, 1
    %s24 = scalar_select %p23, 0, %s22
    %s25 = sadd.s32 1, %s16
    %s26 = scalar_select %p23, %s25, %s16
    %p27 = scmp.ge.s32.totalorder %s26, 2
    %s28 = scalar_select %p27, 0, %s26
    %s29 = ssub.s32 %s16, %s28
    %s30 = ssub.s32 %s17, %s24
    %s31 = sor.u32 %s29, %s30
    %p32 = scmp.eq.s32.totalorder %s31, 0
    %s34 = sadd.s32 %s33, 1
    %s35 = scalar_select %p32, %s33, %s34
    %p38 = pneg %p32
    %p39 = scmp.eq.s32.totalorder %s9, 1
    %p40 = por %p38, %p39
    %p41 = scmp.ne.s32.totalorder %s33, %s36
    %p42 = scmp.eq.s32.totalorder %s9, 0
    %p43 = por %p41, %p42
    %p44 = scmp.ne.s32.totalorder %s33, %s36
    %p45 = scmp.eq.s32.totalorder %s14, 1
    %p46 = por %p44, %p45
    %p47 = scmp.ne.s32.totalorder %s36, %s37
    %p48 = scmp.eq.s32.totalorder %s14, 0
    %p49 = por %p47, %p48
    %p50 = scmp.ne.s32.totalorder %s36, %s37
    %p51 = scmp.eq.s32.totalorder %s15, 1
    %p52 = por %p50, %p51
    %p54 = scmp.ne.s32.totalorder %s37, %s53
    %p55 = scmp.eq.s32.totalorder %s15, 0
    %p56 = por %p54, %p55
    %s57 = ssub.s32 %s17, %s24
    %p58 = scmp.eq.s32.totalorder %s57, 0
    %s60 = sadd.s32 %s59, 1
    %s61 = scalar_select %p58, %s59, %s60
    %p64 = pneg %p58
    %p65 = scmp.eq.s32.totalorder %s9, 1
    %p66 = por %p64, %p65
    %p67 = scmp.ne.s32.totalorder %s59, %s62
    %p68 = scmp.eq.s32.totalorder %s9, 0
    %p69 = por %p67, %p68
    %p70 = scmp.ne.s32.totalorder %s59, %s62
    %p71 = scmp.eq.s32.totalorder %s14, 1
    %p72 = por %p70, %p71
    %p73 = scmp.ne.s32.totalorder %s62, %s63
    %p74 = scmp.eq.s32.totalorder %s14, 0
    %p75 = por %p73, %p74
    %p76 = scmp.ne.s32.totalorder %s62, %s63
    %p77 = scmp.eq.s32.totalorder %s15, 1
    %p78 = por %p76, %p77
    %p80 = scmp.ne.s32.totalorder %s63, %s79
    %p81 = scmp.eq.s32.totalorder %s15, 0
    %p82 = por %p80, %p81
    %s84 = sadd.s32 %s83, 1
    %p87 = scmp.eq.s32.totalorder %s9, 1
    %p88 = scmp.ne.s32.totalorder %s83, %s85
    %p89 = scmp.eq.s32.totalorder %s9, 0
    %p90 = por %p88, %p89
    %p91 = scmp.ne.s32.totalorder %s83, %s85
    %p92 = scmp.eq.s32.totalorder %s14, 1
    %p93 = por %p91, %p92
    %p94 = scmp.ne.s32.totalorder %s85, %s86
    %p95 = scmp.eq.s32.totalorder %s14, 0
    %p96 = por %p94, %p95
    %p97 = scmp.ne.s32.totalorder %s85, %s86
    %p98 = scmp.eq.s32.totalorder %s15, 1
    %p99 = por %p97, %p98
    %p101 = scmp.ne.s32.totalorder %s86, %s100
    %p102 = scmp.eq.s32.totalorder %s15, 0
    %p103 = por %p101, %p102
    %s104 = ssub.s32 %s16, %s28
    %p105 = scmp.eq.s32.totalorder %s104, 0
    %s107 = sadd.s32 %s106, 1
    %s108 = scalar_select %p105, %s106, %s107
    %p111 = pneg %p105
    %p112 = scmp.eq.s32.totalorder %s9, 1
    %p113 = por %p111, %p112
    %p114 = scmp.ne.s32.totalorder %s106, %s109
    %p115 = scmp.eq.s32.totalorder %s9, 0
    %p116 = por %p114, %p115
    %p117 = scmp.ne.s32.totalorder %s106, %s109
    %p118 = scmp.eq.s32.totalorder %s14, 1
    %p119 = por %p117, %p118
    %p120 = scmp.ne.s32.totalorder %s109, %s110
    %p121 = scmp.eq.s32.totalorder %s14, 0
    %p122 = por %p120, %p121
    %p123 = scmp.ne.s32.totalorder %s109, %s110
    %p124 = scmp.eq.s32.totalorder %s15, 1
    %p125 = por %p123, %p124
    %p127 = scmp.ne.s32.totalorder %s110, %s126
    %p128 = scmp.eq.s32.totalorder %s15, 0
    %p129 = por %p127, %p128
    %p130 = scmp.le.s32.totalorder 1, %s9
    %p131 = scmp.lt.s32.totalorder %s9, 3
    %p132 = pnand %p130, %p131
    %p133 = pneg %p132
    // Predicated region
    $region9: #{tpu_custom_call.1} parent=5 // pred_check
      _
    $region10: #{tpu_custom_call.1} parent=5 // pred_check_branch
      %135 = sbr.rel (%p132) target = $region12
    $region11: #{tpu_custom_call.1} parent=5 // pred_region
      %s136 = ssub.s32 %s9, 1
      // Predicated region
      $region13: #{tpu_custom_call.1} parent=11 // pred_check
        %p137 = pneg %p75
      $region14: #{tpu_custom_call.1} parent=11 // pred_check_branch
        %139 = sbr.rel (%p137) target = $region16
      $region15: #{tpu_custom_call.1} parent=11 // pred_region
        %p140 = scmp.lt.s32.totalorder %s19, 0
        %s141 = scalar_select %p140, %s19, 0
        %s142 = smul.addr %s141, 4
        %s143 = scalar_lea.vmem %s1, %s142
      $region16: #{tpu_custom_call.1} parent=11 // pred_fallthru
        _
      // Predicated region
      $region17: #{tpu_custom_call.1} parent=11 // pred_check
        %p144 = pneg %p96
      $region18: #{tpu_custom_call.1} parent=11 // pred_check_branch
        %146 = sbr.rel (%p144) target = $region20
      $region19: #{tpu_custom_call.1} parent=11 // pred_region
        _
      $region20: #{tpu_custom_call.1} parent=11 // pred_fallthru
        _
    $region12: #{tpu_custom_call.1} parent=5 // pred_fallthru
      _
    %p147 = scmp.lt.s32.totalorder %s9, 2
    // Predicated region
    $region21: #{tpu_custom_call.1} parent=5 // pred_check
      %p148 = pneg %p147
    $region22: #{tpu_custom_call.1} parent=5 // pred_check_branch
      %150 = sbr.rel (%p148) target = $region24
    $region23: #{tpu_custom_call.1} parent=5 // pred_region
      // Predicated region
      $region25: #{tpu_custom_call.1} parent=23 // pred_check
        %p151 = pneg %p43
      $region26: #{tpu_custom_call.1} parent=23 // pred_check_branch
        %153 = sbr.rel (%p151) target = $region28
      $region27: #{tpu_custom_call.1} parent=23 // pred_region
        %s154 = smul.u32 4, %s16
        %p155 = scmp.lt.s32.totalorder %s154, 7
        %s156 = scalar_select %p155, %s154, 7
        %p157 = scmp.lt.s32.totalorder %s17, 0
        %s158 = scalar_select %p157, %s17, 0
        %s159 = sadd.s32 %s158, %s156
        %s160 = smul.addr %s159, 8
        %s161 = scalar_lea.vmem %s0, %s160
        %s162 = smul.u32 4, %s16
      $region28: #{tpu_custom_call.1} parent=23 // pred_fallthru
        _
    $region24: #{tpu_custom_call.1} parent=5 // pred_fallthru
      _
    %p163 = scmp.le.s32.totalorder 1, %s9
    %p164 = scmp.lt.s32.totalorder %s9, 3
    %p165 = pnand %p163, %p164
    %p166 = pneg %p165
    // Predicated region
    $region29: #{tpu_custom_call.1} parent=5 // pred_check
      _
    $region30: #{tpu_custom_call.1} parent=5 // pred_check_branch
      %168 = sbr.rel (%p165) target = $region32
    $region31: #{tpu_custom_call.1} parent=5 // pred_region
      %s169 = ssub.s32 %s9, 1
      %s170 = smul.u32 4, %s18
      %p171 = scmp.lt.s32.totalorder %s170, 7
      %s172 = scalar_select %p171, %s170, 7
      %p173 = scmp.lt.s32.totalorder %s19, 0
      %s174 = scalar_select %p173, %s19, 0
      %s175 = sadd.s32 %s174, %s172
      %s176 = smul.addr %s175, 8
      %s177 = scalar_lea.vmem %s0, %s176
      %p178 = pneg %p49
      %p179 = pneg %p46
      %p180 = scmp.lt.s32.totalorder %s19, 0
      %s181 = scalar_select %p180, %s19, 0
      %s182 = smul.addr %s181, 4
      %s183 = scalar_lea.vmem %s1, %s182
      %p184 = pneg %p75
      %p185 = pneg %p72
      %p186 = pneg %p96
      %p187 = pneg %p93
      %p188 = pneg %p122
      %p189 = pneg %p119
      %s190 = smul.u32 4, %s18
      %p191 = scmp.lt.s32.totalorder %s190, 7
      %s192 = scalar_select %p191, %s190, 7
      %s193 = smul.addr %s192, 8
      %s194 = scalar_lea.vmem %s3, %s193
      %s195 = smul.u32 4, %s18
      %p196 = scmp.lt.s32.totalorder %s195, 7
      %s197 = scalar_select %p196, %s195, 7
      %p198 = scmp.lt.s32.totalorder %s19, 0
      %s199 = scalar_select %p198, %s19, 0
      %s200 = sadd.s32 %s199, %s197
      %s201 = smul.addr %s200, 8
      %s202 = scalar_lea.vmem %s0, %s201
      %s203 = smul.u32 4, %s18
      %p204 = scmp.lt.s32.totalorder %s19, 0
      %s205 = scalar_select %p204, %s19, 0
      %s206 = smul.addr %s205, 4
      %s207 = scalar_lea.vmem %s1, %s206
      %s208 = smul.u32 4, %s18
      %p209 = scmp.lt.s32.totalorder %s208, 7
      %s210 = scalar_select %p209, %s208, 7
      %s211 = smul.addr %s210, 8
      %s212 = scalar_lea.vmem %s3, %s211
      %s213 = smul.u32 4, %s18
      %p214 = scmp.eq.s32.totalorder %s19, 0
      // Predicated region
      $region33: #{tpu_custom_call.1} parent=31 // pred_check
        %p215 = pneg %p214
      $region34: #{tpu_custom_call.1} parent=31 // pred_check_branch
        %217 = sbr.rel (%p215) target = $region36
      $region35: #{tpu_custom_call.1} parent=31 // pred_region
        %vm218 = vcmask 31744
        %219 = vst.msk [vmem:[#allocation2] sm:$0xff] %vm218, 0.0
        %220 = vst.msk [vmem:[#allocation2 + $0x8] sm:$0xff] %vm218, 0.0
        %221 = vst.msk [vmem:[#allocation2 + $0x10] sm:$0xff] %vm218, 0.0
        %222 = vst.msk [vmem:[#allocation2 + $0x18] sm:$0xff] %vm218, 0.0
      $region36: #{tpu_custom_call.1} parent=31 // pred_fallthru
        _
      %v223 = vld [vmem:[%s202] sm:$0xff]
      %v224 = vld [vmem:[%s202 + $0x8] sm:$0xff]
      %v225 = vld [vmem:[%s202 + $0x10] sm:$0xff]
      %v226 = vld [vmem:[%s202 + $0x18] sm:$0xff]
      %v227 = vld [vmem:[%s207] sm:$0xf]
      %v228 = vld [vmem:[#allocation2] sm:$0xff]
      %v229 = vld [vmem:[#allocation2 + $0x8] sm:$0xff]
      %v230 = vld [vmem:[#allocation2 + $0x10] sm:$0xff]
      %v231 = vld [vmem:[#allocation2 + $0x18] sm:$0xff]
      %vm232 = vcmask 261120
      %v234 = vsel %vm232, %v223, 0
      %v237 = vsel %vm232, %v224, 0
      %v240 = vsel %vm232, %v225, 0
      %v243 = vsel %vm232, %v226, 0
      %v246 = vsel %vm232, %v227, 0
      %248 = vmatpush.xpose.msra.mxu0 0.0
      %249 = vmatpush.xpose.msra.mxu0 0.0
      %250 = vmatpush.xpose.msra.mxu0 0.0
      %251 = vmatpush.xpose.msra.mxu0 0.0
      %252 = vmatpush.xpose.msra.mxu0 0.0
      %253 = vmatpush.xpose.msra.mxu0 0.0
      %254 = vmatpush.xpose.msra.mxu0 0.0
      %255 = vmatpush.xpose.msra.mxu0 0.0
      %256 = vmatpush.xpose.msra.mxu0 0.0
      %257 = vmatpush.xpose.msra.mxu0 0.0
      %258 = vmatpush.xpose.msra.mxu0 0.0
      %259 = vmatpush.xpose.msra.mxu0 0.0
      %260 = vmatpush.xpose.msra.mxu0 0.0
      %261 = vmatpush.xpose.msra.mxu0 0.0
      %262 = vmatpush.xpose.msra.mxu0 0.0
      %v263 = vand.u32 %v246, 4294901760
      %264 = vmatpush.xpose.msra.mxu0 %v263
      %v265 = vand.u32 %v234, 4294901760
      %v266 = vsub.f32 %v234, %v265
      %v267 = vand.u32 %v266, 4294901760
      %v268 = vsub.f32 %v266, %v267
      %v269 = vand.u32 %v268, 4294901760
      %270 = vmatmul.f32.gmra.mxu0 %v269
      %v271 = vpop.f32.mrf.mxu0
      %v272 = vadd.f32 0.0, %v271
      %v273 = vand.u32 %v237, 4294901760
      %v274 = vsub.f32 %v237, %v273
      %v275 = vand.u32 %v274, 4294901760
      %v276 = vsub.f32 %v274, %v275
      %v277 = vand.u32 %v276, 4294901760
      %278 = vmatmul.f32.gmra.mxu0 %v277
      %v279 = vpop.f32.mrf.mxu0
      %v280 = vadd.f32 0.0, %v279
      %v281 = vand.u32 %v240, 4294901760
      %v282 = vsub.f32 %v240, %v281
      %v283 = vand.u32 %v282, 4294901760
      %v284 = vsub.f32 %v282, %v283
      %v285 = vand.u32 %v284, 4294901760
      %286 = vmatmul.f32.gmra.mxu0 %v285
      %v287 = vpop.f32.mrf.mxu0
      %v288 = vadd.f32 0.0, %v287
      %v289 = vand.u32 %v243, 4294901760
      %v290 = vsub.f32 %v243, %v289
      %v291 = vand.u32 %v290, 4294901760
      %v292 = vsub.f32 %v290, %v291
      %v293 = vand.u32 %v292, 4294901760
      %294 = vmatmul.f32.gmra.mxu0 %v293
      %v295 = vpop.f32.mrf.mxu0
      %v296 = vadd.f32 0.0, %v295
      %297 = vdwg.mxu0
      %298 = vmatpush.xpose.msra.mxu0 0.0
      %299 = vmatpush.xpose.msra.mxu0 0.0
      %300 = vmatpush.xpose.msra.mxu0 0.0
      %301 = vmatpush.xpose.msra.mxu0 0.0
      %302 = vmatpush.xpose.msra.mxu0 0.0
      %303 = vmatpush.xpose.msra.mxu0 0.0
      %304 = vmatpush.xpose.msra.mxu0 0.0
      %305 = vmatpush.xpose.msra.mxu0 0.0
      %306 = vmatpush.xpose.msra.mxu0 0.0
      %307 = vmatpush.xpose.msra.mxu0 0.0
      %308 = vmatpush.xpose.msra.mxu0 0.0
      %309 = vmatpush.xpose.msra.mxu0 0.0
      %310 = vmatpush.xpose.msra.mxu0 0.0
      %311 = vmatpush.xpose.msra.mxu0 0.0
      %312 = vmatpush.xpose.msra.mxu0 0.0
      %v313 = vand.u32 %v246, 4294901760
      %v314 = vsub.f32 %v246, %v313
      %v315 = vand.u32 %v314, 4294901760
      %v316 = vsub.f32 %v314, %v315
      %v317 = vand.u32 %v316, 4294901760
      %318 = vmatpush.xpose.msra.mxu0 %v317
      %v319 = vand.u32 %v234, 4294901760
      %320 = vmatmul.f32.gmra.mxu0 %v319
      %v321 = vpop.f32.mrf.mxu0
      %v322 = vadd.f32 %v272, %v321
      %v323 = vand.u32 %v237, 4294901760
      %324 = vmatmul.f32.gmra.mxu0 %v323
      %v325 = vpop.f32.mrf.mxu0
      %v326 = vadd.f32 %v280, %v325
      %v327 = vand.u32 %v240, 4294901760
      %328 = vmatmul.f32.gmra.mxu0 %v327
      %v329 = vpop.f32.mrf.mxu0
      %v330 = vadd.f32 %v288, %v329
      %v331 = vand.u32 %v243, 4294901760
      %332 = vmatmul.f32.gmra.mxu0 %v331
      %v333 = vpop.f32.mrf.mxu0
      %v334 = vadd.f32 %v296, %v333
      %335 = vdwg.mxu0
      %336 = vmatpush.xpose.msra.mxu0 0.0
      %337 = vmatpush.xpose.msra.mxu0 0.0
      %338 = vmatpush.xpose.msra.mxu0 0.0
      %339 = vmatpush.xpose.msra.mxu0 0.0
      %340 = vmatpush.xpose.msra.mxu0 0.0
      %341 = vmatpush.xpose.msra.mxu0 0.0
      %342 = vmatpush.xpose.msra.mxu0 0.0
      %343 = vmatpush.xpose.msra.mxu0 0.0
      %344 = vmatpush.xpose.msra.mxu0 0.0
      %345 = vmatpush.xpose.msra.mxu0 0.0
      %346 = vmatpush.xpose.msra.mxu0 0.0
      %347 = vmatpush.xpose.msra.mxu0 0.0
      %348 = vmatpush.xpose.msra.mxu0 0.0
      %349 = vmatpush.xpose.msra.mxu0 0.0
      %350 = vmatpush.xpose.msra.mxu0 0.0
      %v351 = vand.u32 %v246, 4294901760
      %v352 = vsub.f32 %v246, %v351
      %353 = vmatpush.xpose.msra.mxu0 %v352
      %v354 = vand.u32 %v234, 4294901760
      %v355 = vsub.f32 %v234, %v354
      %356 = vmatmul.f32.gmra.mxu0 %v355
      %v357 = vpop.f32.mrf.mxu0
      %v358 = vadd.f32 %v322, %v357
      %v359 = vand.u32 %v237, 4294901760
      %v360 = vsub.f32 %v237, %v359
      %361 = vmatmul.f32.gmra.mxu0 %v360
      %v362 = vpop.f32.mrf.mxu0
      %v363 = vadd.f32 %v326, %v362
      %v364 = vand.u32 %v240, 4294901760
      %v365 = vsub.f32 %v240, %v364
      %366 = vmatmul.f32.gmra.mxu0 %v365
      %v367 = vpop.f32.mrf.mxu0
      %v368 = vadd.f32 %v330, %v367
      %v369 = vand.u32 %v243, 4294901760
      %v370 = vsub.f32 %v243, %v369
      %371 = vmatmul.f32.gmra.mxu0 %v370
      %v372 = vpop.f32.mrf.mxu0
      %v373 = vadd.f32 %v334, %v372
      %374 = vdwg.mxu0
      %375 = vmatpush.xpose.msra.mxu0 0.0
      %376 = vmatpush.xpose.msra.mxu0 0.0
      %377 = vmatpush.xpose.msra.mxu0 0.0
      %378 = vmatpush.xpose.msra.mxu0 0.0
      %379 = vmatpush.xpose.msra.mxu0 0.0
      %380 = vmatpush.xpose.msra.mxu0 0.0
      %381 = vmatpush.xpose.msra.mxu0 0.0
      %382 = vmatpush.xpose.msra.mxu0 0.0
      %383 = vmatpush.xpose.msra.mxu0 0.0
      %384 = vmatpush.xpose.msra.mxu0 0.0
      %385 = vmatpush.xpose.msra.mxu0 0.0
      %386 = vmatpush.xpose.msra.mxu0 0.0
      %387 = vmatpush.xpose.msra.mxu0 0.0
      %388 = vmatpush.xpose.msra.mxu0 0.0
      %389 = vmatpush.xpose.msra.mxu0 0.0
      %v390 = vand.u32 %v246, 4294901760
      %391 = vmatpush.xpose.msra.mxu0 %v390
      %v392 = vand.u32 %v234, 4294901760
      %v393 = vsub.f32 %v234, %v392
      %v394 = vand.u32 %v393, 4294901760
      %395 = vmatmul.f32.gmra.mxu0 %v394
      %v396 = vpop.f32.mrf.mxu0
      %v397 = vadd.f32 %v358, %v396
      %v398 = vand.u32 %v237, 4294901760
      %v399 = vsub.f32 %v237, %v398
      %v400 = vand.u32 %v399, 4294901760
      %401 = vmatmul.f32.gmra.mxu0 %v400
      %v402 = vpop.f32.mrf.mxu0
      %v403 = vadd.f32 %v363, %v402
      %v404 = vand.u32 %v240, 4294901760
      %v405 = vsub.f32 %v240, %v404
      %v406 = vand.u32 %v405, 4294901760
      %407 = vmatmul.f32.gmra.mxu0 %v406
      %v408 = vpop.f32.mrf.mxu0
      %v409 = vadd.f32 %v368, %v408
      %v410 = vand.u32 %v243, 4294901760
      %v411 = vsub.f32 %v243, %v410
      %v412 = vand.u32 %v411, 4294901760
      %413 = vmatmul.f32.gmra.mxu0 %v412
      %v414 = vpop.f32.mrf.mxu0
      %v415 = vadd.f32 %v373, %v414
      %416 = vdwg.mxu0
      %417 = vmatpush.xpose.msra.mxu0 0.0
      %418 = vmatpush.xpose.msra.mxu0 0.0
      %419 = vmatpush.xpose.msra.mxu0 0.0
      %420 = vmatpush.xpose.msra.mxu0 0.0
      %421 = vmatpush.xpose.msra.mxu0 0.0
      %422 = vmatpush.xpose.msra.mxu0 0.0
      %423 = vmatpush.xpose.msra.mxu0 0.0
      %424 = vmatpush.xpose.msra.mxu0 0.0
      %425 = vmatpush.xpose.msra.mxu0 0.0
      %426 = vmatpush.xpose.msra.mxu0 0.0
      %427 = vmatpush.xpose.msra.mxu0 0.0
      %428 = vmatpush.xpose.msra.mxu0 0.0
      %429 = vmatpush.xpose.msra.mxu0 0.0
      %430 = vmatpush.xpose.msra.mxu0 0.0
      %431 = vmatpush.xpose.msra.mxu0 0.0
      %v432 = vand.u32 %v246, 4294901760
      %v433 = vsub.f32 %v246, %v432
      %v434 = vand.u32 %v433, 4294901760
      %435 = vmatpush.xpose.msra.mxu0 %v434
      %v436 = vand.u32 %v234, 4294901760
      %437 = vmatmul.f32.gmra.mxu0 %v436
      %v438 = vpop.f32.mrf.mxu0
      %v439 = vadd.f32 %v397, %v438
      %v440 = vand.u32 %v237, 4294901760
      %441 = vmatmul.f32.gmra.mxu0 %v440
      %v442 = vpop.f32.mrf.mxu0
      %v443 = vadd.f32 %v403, %v442
      %v444 = vand.u32 %v240, 4294901760
      %445 = vmatmul.f32.gmra.mxu0 %v444
      %v446 = vpop.f32.mrf.mxu0
      %v447 = vadd.f32 %v409, %v446
      %v448 = vand.u32 %v243, 4294901760
      %449 = vmatmul.f32.gmra.mxu0 %v448
      %v450 = vpop.f32.mrf.mxu0
      %v451 = vadd.f32 %v415, %v450
      %452 = vdwg.mxu0
      %453 = vmatpush.xpose.msra.mxu0 0.0
      %454 = vmatpush.xpose.msra.mxu0 0.0
      %455 = vmatpush.xpose.msra.mxu0 0.0
      %456 = vmatpush.xpose.msra.mxu0 0.0
      %457 = vmatpush.xpose.msra.mxu0 0.0
      %458 = vmatpush.xpose.msra.mxu0 0.0
      %459 = vmatpush.xpose.msra.mxu0 0.0
      %460 = vmatpush.xpose.msra.mxu0 0.0
      %461 = vmatpush.xpose.msra.mxu0 0.0
      %462 = vmatpush.xpose.msra.mxu0 0.0
      %463 = vmatpush.xpose.msra.mxu0 0.0
      %464 = vmatpush.xpose.msra.mxu0 0.0
      %465 = vmatpush.xpose.msra.mxu0 0.0
      %466 = vmatpush.xpose.msra.mxu0 0.0
      %467 = vmatpush.xpose.msra.mxu0 0.0
      %v468 = vand.u32 %v246, 4294901760
      %469 = vmatpush.xpose.msra.mxu0 %v468
      %v470 = vand.u32 %v234, 4294901760
      %471 = vmatmul.f32.gmra.mxu0 %v470
      %v472 = vpop.f32.mrf.mxu0
      %v473 = vadd.f32 %v439, %v472
      %v474 = vand.u32 %v237, 4294901760
      %475 = vmatmul.f32.gmra.mxu0 %v474
      %v476 = vpop.f32.mrf.mxu0
      %v477 = vadd.f32 %v443, %v476
      %v478 = vand.u32 %v240, 4294901760
      %479 = vmatmul.f32.gmra.mxu0 %v478
      %v480 = vpop.f32.mrf.mxu0
      %v481 = vadd.f32 %v447, %v480
      %v482 = vand.u32 %v243, 4294901760
      %483 = vmatmul.f32.gmra.mxu0 %v482
      %v484 = vpop.f32.mrf.mxu0
      %v485 = vadd.f32 %v451, %v484
      %486 = vdwg.mxu0
      %v487 = vadd.f32 %v228, %v473
      %v488 = vadd.f32 %v229, %v477
      %v489 = vadd.f32 %v230, %v481
      %v490 = vadd.f32 %v231, %v485
      %vm491 = vcmask 31744
      %492 = vst.msk [vmem:[#allocation2] sm:$0xff] %vm491, %v487
      %493 = vst.msk [vmem:[#allocation2 + $0x8] sm:$0xff] %vm491, %v488
      %494 = vst.msk [vmem:[#allocation2 + $0x10] sm:$0xff] %vm491, %v489
      %495 = vst.msk [vmem:[#allocation2 + $0x18] sm:$0xff] %vm491, %v490
      // Predicated region
      $region37: #{tpu_custom_call.1} parent=31 // pred_check
        %p496 = pneg %p214
      $region38: #{tpu_custom_call.1} parent=31 // pred_check_branch
        %498 = sbr.rel (%p496) target = $region40
      $region39: #{tpu_custom_call.1} parent=31 // pred_region
        %v499 = vld [vmem:[#allocation2] sm:$0xff]
        %v500 = vld [vmem:[#allocation2 + $0x8] sm:$0xff]
        %v501 = vld [vmem:[#allocation2 + $0x10] sm:$0xff]
        %v502 = vld [vmem:[#allocation2 + $0x18] sm:$0xff]
        %v503 = vld [vmem:[%s2] sm:$0x1]
        %v505 = vperm.slane %v503, 0
        %v507 = vadd.f32 %v499, %v505
        %v508 = vadd.f32 %v500, %v505
        %v509 = vadd.f32 %v501, %v505
        %v510 = vadd.f32 %v502, %v505
        %511 = vst.msk [vmem:[%s212] sm:$0xff] %vm491, %v507
        %512 = vst.msk [vmem:[%s212 + $0x8] sm:$0xff] %vm491, %v508
        %513 = vst.msk [vmem:[%s212 + $0x10] sm:$0xff] %vm491, %v509
        %514 = vst.msk [vmem:[%s212 + $0x18] sm:$0xff] %vm491, %v510
      $region40: #{tpu_custom_call.1} parent=31 // pred_fallthru
        _
      %s515 = smul.u32 4, %s18
      %p516 = scmp.lt.s32.totalorder %s515, 7
      %s517 = scalar_select %p516, %s515, 7
      %s518 = smul.addr %s517, 8
      %s519 = scalar_lea.vmem %s3, %s518
      // Predicated region
      $region41: #{tpu_custom_call.1} parent=31 // pred_check
        %p520 = pneg %p119
      $region42: #{tpu_custom_call.1} parent=31 // pred_check_branch
        %522 = sbr.rel (%p520) target = $region44
      $region43: #{tpu_custom_call.1} parent=31 // pred_region
        %s523 = smul.u32 4, %s18
      $region44: #{tpu_custom_call.1} parent=31 // pred_fallthru
        _
    $region32: #{tpu_custom_call.1} parent=5 // pred_fallthru
      _
    %p524 = scmp.le.s32.totalorder 2, %s9
    // Predicated region
    $region45: #{tpu_custom_call.1} parent=5 // pred_check
      %p525 = pneg %p524
    $region46: #{tpu_custom_call.1} parent=5 // pred_check_branch
      %527 = sbr.rel (%p525) target = $region48
    $region47: #{tpu_custom_call.1} parent=5 // pred_region
      %s528 = ssub.s32 %s9, 2
      // Predicated region
      $region49: #{tpu_custom_call.1} parent=47 // pred_check
        %p529 = pneg %p125
      $region50: #{tpu_custom_call.1} parent=47 // pred_check_branch
        %531 = sbr.rel (%p529) target = $region52
      $region51: #{tpu_custom_call.1} parent=47 // pred_region
        %s532 = smul.u32 4, %s20
        %p533 = scmp.lt.s32.totalorder %s532, 7
        %s534 = scalar_select %p533, %s532, 7
        %s535 = smul.addr %s534, 8
        %s536 = scalar_lea.vmem %s3, %s535
      $region52: #{tpu_custom_call.1} parent=47 // pred_fallthru
        _
    $region48: #{tpu_custom_call.1} parent=5 // pred_fallthru
      _
  $region6: #{tpu_custom_call.1} parent=0 // loop_footer
    %s13 = sadd.s32 1, %s9
  $region7: #{tpu_custom_call.1} parent=0 // loop_footer_branch
    %8 = sbr.rel target = $region3
  $region8: #{tpu_custom_call.1} parent=0 // loop_exit
    _

</llo_original>
